<compile_context>
chip_gen: v7x
topology: tpu7x:2x2x1
jax: 0.10.0
libtpu: 0.0.40
codegen_flags: <defaults>
</compile_context>

<pallas_src>
import functools

import jax
import jax.numpy as jnp
from jax.experimental import pallas as pl
from jax.experimental.pallas import tpu as pltpu


_LANE = 128      # TPU lane width: pad the output feature dim to this
_TN_MAX = 1024   # max rows per grid step; bounds per-tile VMEM on all chips


def _round_up(x, m):
    return (x + m - 1) // m * m


def mlp_kernel(x_ref, w1t_ref, b1_ref, w2t_ref, b2_ref, o_ref):
    """One (TN, F) batch tile: hidden Linear -> ReLU -> predict Linear, fused in VMEM.

    x_ref   : (TN, F)      f32   (streamed over the batch grid)
    w1t_ref : (F,  H)      bf16  (= hidden.weight.T, resident)
    b1_ref  : (1,  H)      f32
    w2t_ref : (H,  O_pad)  bf16  (= predict.weight.T, zero-padded to 128 lanes)
    b2_ref  : (1,  O_pad)  f32
    o_ref   : (TN, O_pad)  f32
    """
    x = x_ref[...].astype(w1t_ref.dtype)                       # bf16 for the MXU
    h = jnp.dot(x, w1t_ref[...], preferred_element_type=jnp.float32)
    h = jnp.maximum(h + b1_ref[...], 0.0)                      # bias + ReLU in f32
    out = jnp.dot(h.astype(w2t_ref.dtype), w2t_ref[...],
                  preferred_element_type=jnp.float32)
    o_ref[...] = (out + b2_ref[...]).astype(o_ref.dtype)


def prepare_params(w1, b1, w2, b2, *, matmul_dtype=jnp.bfloat16):
    """One-time parameter preparation (do NOT repeat per forward call).

    w1: (H, F), b1: (H,), w2: (O, H), b2: (O,)  -- PyTorch nn.Linear layout.
    Returns kernel-layout params: transposed to (fan_in, fan_out), output dim
    zero-padded to a multiple of 128 lanes, weights cast to bf16.
    """
    h, f = w1.shape
    o = w2.shape[0]
    o_pad = _round_up(o, _LANE)

    w1t = jnp.asarray(w1, jnp.float32).T.astype(matmul_dtype)          # (F, H)
    b1r = jnp.asarray(b1, jnp.float32).reshape(1, h)                   # (1, H)
    w2_pad = jnp.zeros((o_pad, h), jnp.float32).at[:o, :].set(
        jnp.asarray(w2, jnp.float32))
    w2t = w2_pad.T.astype(matmul_dtype)                                # (H, O_pad)
    b2r = jnp.zeros((1, o_pad), jnp.float32).at[0, :o].set(
        jnp.asarray(b2, jnp.float32))                                  # (1, O_pad)

    return {"w1t": w1t, "b1": b1r, "w2t": w2t, "b2": b2r, "n_output": o}


@functools.partial(jax.jit, static_argnames=("n_output", "tn"))
def net_forward(x, w1t, b1, w2t, b2, *, n_output, tn=_TN_MAX):
    """x: (N, F) f32. Returns (N, n_output) f32."""
    n, f = x.shape
    h = w1t.shape[1]
    o_pad = w2t.shape[1]

    # Batch tile: biggest tile up to _TN_MAX, sublane-aligned; pad N to a multiple.
    tn = min(tn, _round_up(n, 8))
    n_pad = _round_up(n, tn)
    if n_pad != n:
        x = jnp.pad(x, ((0, n_pad - n), (0, 0)))

    grid = (n_pad // tn,)
    cost = pl.CostEstimate(
        flops=2 * n_pad * (f * h + h * o_pad),
        transcendentals=0,
        bytes_accessed=(n_pad * f * 4 + w1t.size * 2 + w2t.size * 2
                        + b1.size * 4 + b2.size * 4 + n_pad * o_pad * 4),
    )

    out = pl.pallas_call(
        mlp_kernel,
        out_shape=jax.ShapeDtypeStruct((n_pad, o_pad), jnp.float32),
        grid=grid,
        in_specs=[
            pl.BlockSpec((tn, f), lambda i: (i, 0)),       # x streams over N
            pl.BlockSpec((f, h), lambda i: (0, 0)),        # weights stay resident
            pl.BlockSpec((1, h), lambda i: (0, 0)),
            pl.BlockSpec((h, o_pad), lambda i: (0, 0)),
            pl.BlockSpec((1, o_pad), lambda i: (0, 0)),
        ],
        out_specs=pl.BlockSpec((tn, o_pad), lambda i: (i, 0)),
        compiler_params=pltpu.CompilerParams(
            dimension_semantics=("parallel",),             # megacore sharding on v7x
        ),
        cost_estimate=cost,
    )(x, w1t, b1, w2t, b2)

    return out[:n, :n_output]


def _torch_linear_init(key, fan_out, fan_in):
    """Deterministic U(-1/sqrt(fan_in), 1/sqrt(fan_in)) init, like torch.nn.Linear."""
    kw, kb = jax.random.split(key)
    bound = 1.0 / (fan_in ** 0.5)
    w = jax.random.uniform(kw, (fan_out, fan_in), jnp.float32, -bound, bound)
    b = jax.random.uniform(kb, (fan_out,), jnp.float32, -bound, bound)
    return w, b


if __name__ == "__main__":
    # Shapes matching the original regression script: x = linspace(-1, 1, 100)[:, None],
    # Net(n_feature=1, n_hidden=10, n_output=1).
    N, n_feature, n_hidden, n_output = 100, 1, 10, 1

    key = jax.random.PRNGKey(0)
    k1, k2 = jax.random.split(key, 2)

    x = jnp.linspace(-1.0, 1.0, N, dtype=jnp.float32).reshape(N, n_feature)
    w1, b1 = _torch_linear_init(k1, n_hidden, n_feature)   # hidden:  (H, F), (H,)
    w2, b2 = _torch_linear_init(k2, n_output, n_hidden)    # predict: (O, H), (O,)

    params = prepare_params(w1, b1, w2, b2)                # one-time prep
    out = net_forward(x, params["w1t"], params["b1"], params["w2t"], params["b2"],
                      n_output=params["n_output"])
    out = jax.block_until_ready(out)

    # Pure-JAX f32 reference of the PyTorch forward semantics.
    # Kernel uses bf16 matmul inputs (f32 accumulation), so allow bf16-level tolerance.
    ref = jnp.maximum(x @ w1.T + b1, 0.0) @ w2.T + b2
    assert out.shape == (N, n_output)
    assert jnp.allclose(out, ref, rtol=5e-2, atol=5e-2), \
        f"max abs err {jnp.max(jnp.abs(out - ref))}"

    print("KERNEL_OK")
</pallas_src>

<mosaic_0001>
module attributes {stable_mosaic.version = 11 : i64} {
  func.func @mlp_kernel(%arg0: i32, %arg1: memref<104x1xf32, #tpu.memory_space<vmem>>, %arg2: memref<1x10xbf16, #tpu.memory_space<vmem>>, %arg3: memref<1x10xf32, #tpu.memory_space<vmem>>, %arg4: memref<10x128xbf16, #tpu.memory_space<vmem>>, %arg5: memref<1x128xf32, #tpu.memory_space<vmem>>, %arg6: memref<104x128xf32, #tpu.memory_space<vmem>>) attributes {dimension_semantics = [#tpu.dimension_semantics<parallel>], iteration_bounds = array<i64: 1>, scalar_prefetch = 0 : i64, scratch_operands = 0 : i64, tpu.core_type = #tpu.core_type<tc>, window_params = [{transform_indices = @transform_0, window_bounds = array<i64: 104, 1>}, {pipeline_mode = #tpu.pipeline_mode<synchronous>, transform_indices = @transform_1, window_bounds = array<i64: 1, 10>}, {pipeline_mode = #tpu.pipeline_mode<synchronous>, transform_indices = @transform_2, window_bounds = array<i64: 1, 10>}, {pipeline_mode = #tpu.pipeline_mode<synchronous>, transform_indices = @transform_3, window_bounds = array<i64: 10, 128>}, {pipeline_mode = #tpu.pipeline_mode<synchronous>, transform_indices = @transform_4, window_bounds = array<i64: 1, 128>}, {transform_indices = @transform_5, window_bounds = array<i64: 104, 128>}]} {
    %c0 = arith.constant 0 : index
    %c0_0 = arith.constant 0 : index
    %0 = vector.load %arg1[%c0, %c0_0] : memref<104x1xf32, #tpu.memory_space<vmem>>, vector<104x1xf32>
    %1 = arith.truncf %0 : vector<104x1xf32> to vector<104x1xbf16>
    %c0_1 = arith.constant 0 : index
    %c0_2 = arith.constant 0 : index
    %2 = vector.load %arg2[%c0_1, %c0_2] : memref<1x10xbf16, #tpu.memory_space<vmem>>, vector<1x10xbf16>
    %cst = arith.constant dense<0.000000e+00> : vector<104x10xf32>
    %3 = tpu.matmul %1, %2, %cst {dimension_numbers = #tpu.dot_dimension_numbers<[1], [0], [0], [1], [0, 0, 1, 1], [], []>} : vector<104x1xbf16>, vector<1x10xbf16>, vector<104x10xf32> -> vector<104x10xf32>
    %c0_3 = arith.constant 0 : index
    %c0_4 = arith.constant 0 : index
    %4 = vector.load %arg3[%c0_3, %c0_4] : memref<1x10xf32, #tpu.memory_space<vmem>>, vector<1x10xf32>
    %5 = vector.broadcast %4 : vector<1x10xf32> to vector<104x10xf32>
    %6 = arith.addf %3, %5 : vector<104x10xf32>
    %cst_5 = arith.constant 0.000000e+00 : f32
    %7 = vector.broadcast %cst_5 : f32 to vector<104x10xf32>
    %8 = arith.maximumf %6, %7 : vector<104x10xf32>
    %9 = arith.truncf %8 : vector<104x10xf32> to vector<104x10xbf16>
    %c0_6 = arith.constant 0 : index
    %c0_7 = arith.constant 0 : index
    %10 = vector.load %arg4[%c0_6, %c0_7] : memref<10x128xbf16, #tpu.memory_space<vmem>>, vector<10x128xbf16>
    %cst_8 = arith.constant dense<0.000000e+00> : vector<104x128xf32>
    %11 = tpu.matmul %9, %10, %cst_8 {dimension_numbers = #tpu.dot_dimension_numbers<[1], [0], [0], [1], [0, 0, 1, 1], [], []>} : vector<104x10xbf16>, vector<10x128xbf16>, vector<104x128xf32> -> vector<104x128xf32>
    %c0_9 = arith.constant 0 : index
    %c0_10 = arith.constant 0 : index
    %12 = vector.load %arg5[%c0_9, %c0_10] : memref<1x128xf32, #tpu.memory_space<vmem>>, vector<1x128xf32>
    %13 = vector.broadcast %12 : vector<1x128xf32> to vector<104x128xf32>
    %14 = arith.addf %11, %13 : vector<104x128xf32>
    %c0_11 = arith.constant 0 : index
    %c0_12 = arith.constant 0 : index
    %15 = vector.load %arg6[%c0_11, %c0_12] : memref<104x128xf32, #tpu.memory_space<vmem>>, vector<104x128xf32>
    tpu.vector_store %arg6[%c0_11, %c0_12], %14 {strides = array<i32>} : memref<104x128xf32, #tpu.memory_space<vmem>>, vector<104x128xf32>,
    return
  }
  func.func @transform_0(%arg0: i32) -> (i32, i32) {
    %c0_i32 = arith.constant 0 : i32
    %c0_i32_0 = arith.constant 0 : i32
    return %arg0, %c0_i32 : i32, i32
  }
  func.func @transform_1(%arg0: i32) -> (i32, i32) {
    %c0_i32 = arith.constant 0 : i32
    %c0_i32_0 = arith.constant 0 : i32
    %c0_i32_1 = arith.constant 0 : i32
    return %c0_i32, %c0_i32_0 : i32, i32
  }
  func.func @transform_2(%arg0: i32) -> (i32, i32) {
    %c0_i32 = arith.constant 0 : i32
    %c0_i32_0 = arith.constant 0 : i32
    %c0_i32_1 = arith.constant 0 : i32
    return %c0_i32, %c0_i32_0 : i32, i32
  }
  func.func @transform_3(%arg0: i32) -> (i32, i32) {
    %c0_i32 = arith.constant 0 : i32
    %c0_i32_0 = arith.constant 0 : i32
    %c0_i32_1 = arith.constant 0 : i32
    return %c0_i32, %c0_i32_0 : i32, i32
  }
  func.func @transform_4(%arg0: i32) -> (i32, i32) {
    %c0_i32 = arith.constant 0 : i32
    %c0_i32_0 = arith.constant 0 : i32
    %c0_i32_1 = arith.constant 0 : i32
    return %c0_i32, %c0_i32_0 : i32, i32
  }
  func.func @transform_5(%arg0: i32) -> (i32, i32) {
    %c0_i32 = arith.constant 0 : i32
    %c0_i32_0 = arith.constant 0 : i32
    return %arg0, %c0_i32 : i32, i32
  }
}

</mosaic_0001>

<llo_original>
// kernel: net_forward.1
$region0: #{net_forward.1}
  #allocation0 [shape = 'u32[]', space=smem, size = 0x4, offset = 0x4, fixed_abs, tag = 'smem constant byte address 0x4 - core index']
  #allocation1 [shape = 'u32[144,128]{1,0:T(1,128)}', space=vmem, size = 0x12000, scoped, tag = 'internal scratch']
  %s0 = inlined_call_operand.vmem [shape: f32[104,1], index: 0, kind: input, shape index: {}]
  %s1 = inlined_call_operand.vmem [shape: bf16[1,10], index: 1, kind: input, shape index: {}]
  %s2 = inlined_call_operand.vmem [shape: f32[1,10], index: 2, kind: input, shape index: {}]
  %s3 = inlined_call_operand.vmem [shape: bf16[10,128], index: 3, kind: input, shape index: {}]
  %s4 = inlined_call_operand.vmem [shape: f32[1,128], index: 4, kind: input, shape index: {}]
  %s5 = inlined_call_operand.vmem [shape: f32[104,128], index: 5, kind: output, shape index: {}]
  %s6 = sld [smem:[#allocation0]]
  $region30: #{net_forward.1} parent=0
    _
  %s8 = ssub.s32 1, %s6
  %s9 = scalar_select 0, %s8, %s6
  // Predicated region
  $region2: #{net_forward.1} parent=0 // pred_check
    _
  $region3: #{net_forward.1} parent=0 // pred_check_branch
    %11 = sbr.rel (0) target = $region5
  $region4: #{net_forward.1} parent=0 // pred_region
    _
  $region5: #{net_forward.1} parent=0 // pred_fallthru
    _
  // Predicated region
  $region6: #{net_forward.1} parent=0 // pred_check
    _
  $region7: #{net_forward.1} parent=0 // pred_check_branch
    %13 = sbr.rel (0) target = $region9
  $region8: #{net_forward.1} parent=0 // pred_region
    _
  $region9: #{net_forward.1} parent=0 // pred_fallthru
    _
  // Predicated region
  $region10: #{net_forward.1} parent=0 // pred_check
    _
  $region11: #{net_forward.1} parent=0 // pred_check_branch
    %15 = sbr.rel (0) target = $region13
  $region12: #{net_forward.1} parent=0 // pred_region
    _
  $region13: #{net_forward.1} parent=0 // pred_fallthru
    _
  // Predicated region
  $region14: #{net_forward.1} parent=0 // pred_check
    _
  $region15: #{net_forward.1} parent=0 // pred_check_branch
    %17 = sbr.rel (0) target = $region17
  $region16: #{net_forward.1} parent=0 // pred_region
    _
  $region17: #{net_forward.1} parent=0 // pred_fallthru
    _
  // Predicated region
  $region18: #{net_forward.1} parent=0 // pred_check
    _
  $region19: #{net_forward.1} parent=0 // pred_check_branch
    %19 = sbr.rel (0) target = $region21
  $region20: #{net_forward.1} parent=0 // pred_region
    _
  $region21: #{net_forward.1} parent=0 // pred_fallthru
    _
  %v21 = vld [vmem:[%s0] sm:$0xff]
  %v22 = vld [vmem:[%s0 + $0x8] sm:$0xff]
  %v23 = vld [vmem:[%s0 + $0x10] sm:$0xff]
  %v24 = vld [vmem:[%s0 + $0x18] sm:$0xff]
  %v25 = vld [vmem:[%s0 + $0x20] sm:$0xff]
  %v26 = vld [vmem:[%s0 + $0x28] sm:$0xff]
  %v27 = vld [vmem:[%s0 + $0x30] sm:$0xff]
  %v28 = vld [vmem:[%s0 + $0x38] sm:$0xff]
  %v29 = vld [vmem:[%s0 + $0x40] sm:$0xff]
  %v30 = vld [vmem:[%s0 + $0x48] sm:$0xff]
  %v31 = vld [vmem:[%s0 + $0x50] sm:$0xff]
  %v32 = vld [vmem:[%s0 + $0x58] sm:$0xff]
  %v33 = vld [vmem:[%s0 + $0x60] sm:$0xff]
  %v34 = vpack.c.bf16 %v22, %v21
  %v35 = vpack.c.bf16 %v24, %v23
  %v36 = vpack.c.bf16 %v26, %v25
  %v37 = vpack.c.bf16 %v28, %v27
  %v38 = vpack.c.bf16 %v30, %v29
  %v39 = vpack.c.bf16 %v32, %v31
  %v40 = vpack.c.bf16 %v33, %v33
  %v41 = vld [vmem:[%s1] sm:$0x1]
  %v42 = vld [vmem:[%s2] sm:$0x1]
  %v44 = vlaneseq
  %v45 = vshrl.u32 %v44, 7
  %v46 = vsub.s32 0, %v45
  %v47 = vrot.slane %v42, %v46
  %vm49 = vcmask 7168
  %v51 = vsel %vm49, %v34, 0
  %v54 = vsel %vm49, %v35, 0
  %v57 = vsel %vm49, %v36, 0
  %v60 = vsel %vm49, %v37, 0
  %v63 = vsel %vm49, %v38, 0
  %v66 = vsel %vm49, %v39, 0
  %v69 = vsel %vm49, %v40, 0
  %vm71 = vcmask 1040384
  %v72 = vsel 0, 4294967295, 65535
  %v73 = vsel %vm71, %v72, 0
  %v75 = vand.u32 %v41, %v73
  %77 = vmatprep.subr.bf16.mxu0 0
  %78 = vmatpush1.bf16.msra.mxu0 %v75
  %79 = vmatprep.subr.bf16.mxu0 0
  %80 = vmatpush1.bf16.msra.mxu0 0
  %81 = vmatprep.subr.bf16.mxu0 0
  %82 = vmatpush1.bf16.msra.mxu0 0
  %83 = vmatprep.subr.bf16.mxu0 0
  %84 = vmatpush1.bf16.msra.mxu0 0
  %85 = vmatprep.subr.bf16.mxu0 0
  %86 = vmatpush1.bf16.msra.mxu0 0
  %87 = vmatprep.subr.bf16.mxu0 0
  %88 = vmatpush1.bf16.msra.mxu0 0
  %89 = vmatprep.subr.bf16.mxu0 0
  %90 = vmatpush1.bf16.msra.mxu0 0
  %91 = vmatprep.subr.bf16.mxu0 0
  %92 = vmatpush1.bf16.msra.mxu0 0
  %93 = vmatprep.subr.bf16.mxu0 0
  %94 = vmatpush1.bf16.msra.mxu0 0
  %95 = vmatprep.subr.bf16.mxu0 0
  %96 = vmatpush1.bf16.msra.mxu0 0
  %97 = vmatprep.subr.bf16.mxu0 0
  %98 = vmatpush1.bf16.msra.mxu0 0
  %99 = vmatprep.subr.bf16.mxu0 0
  %100 = vmatpush1.bf16.msra.mxu0 0
  %101 = vmatprep.subr.bf16.mxu0 0
  %102 = vmatpush1.bf16.msra.mxu0 0
  %103 = vmatprep.subr.bf16.mxu0 0
  %104 = vmatpush1.bf16.msra.mxu0 0
  %105 = vmatprep.subr.bf16.mxu0 0
  %106 = vmatpush1.bf16.msra.mxu0 0
  %107 = vmatprep.subr.bf16.mxu0 0
  %108 = vmatpush1.bf16.msra.mxu0 0
  %109 = vmatprep.mubr.bf16.mxu0 0
  %110 = vmatmul.mubr.bf16.gmra.mrb[0].mxu0 %v51
  %v111 = vpop.f32.mrb[0].mxu0
  %v112 = vadd.f32 %v47, %v111
  %v113 = vpop.f32.mrb[0].mxu0
  %v114 = vpop.f32.mrb[0].mxu0
  %v115 = vadd.f32 %v47, %v114
  %v116 = vpop.f32.mrb[0].mxu0
  %117 = vmatprep.mubr.bf16.mxu0 0
  %118 = vmatmul.mubr.bf16.gmra.mrb[0].mxu0 %v54
  %v119 = vpop.f32.mrb[0].mxu0
  %v120 = vadd.f32 %v47, %v119
  %v121 = vpop.f32.mrb[0].mxu0
  %v122 = vpop.f32.mrb[0].mxu0
  %v123 = vadd.f32 %v47, %v122
  %v124 = vpop.f32.mrb[0].mxu0
  %125 = vmatprep.mubr.bf16.mxu0 0
  %126 = vmatmul.mubr.bf16.gmra.mrb[0].mxu0 %v57
  %v127 = vpop.f32.mrb[0].mxu0
  %v128 = vadd.f32 %v47, %v127
  %v129 = vpop.f32.mrb[0].mxu0
  %v130 = vpop.f32.mrb[0].mxu0
  %v131 = vadd.f32 %v47, %v130
  %v132 = vpop.f32.mrb[0].mxu0
  %133 = vmatprep.mubr.bf16.mxu0 0
  %134 = vmatmul.mubr.bf16.gmra.mrb[0].mxu0 %v60
  %v135 = vpop.f32.mrb[0].mxu0
  %v136 = vadd.f32 %v47, %v135
  %v137 = vpop.f32.mrb[0].mxu0
  %v138 = vpop.f32.mrb[0].mxu0
  %v139 = vadd.f32 %v47, %v138
  %v140 = vpop.f32.mrb[0].mxu0
  %141 = vmatprep.mubr.bf16.mxu0 0
  %142 = vmatmul.mubr.bf16.gmra.mrb[0].mxu0 %v63
  %v143 = vpop.f32.mrb[0].mxu0
  %v144 = vadd.f32 %v47, %v143
  %v145 = vpop.f32.mrb[0].mxu0
  %v146 = vpop.f32.mrb[0].mxu0
  %v147 = vadd.f32 %v47, %v146
  %v148 = vpop.f32.mrb[0].mxu0
  %149 = vmatprep.mubr.bf16.mxu0 0
  %150 = vmatmul.mubr.bf16.gmra.mrb[0].mxu0 %v66
  %v151 = vpop.f32.mrb[0].mxu0
  %v152 = vadd.f32 %v47, %v151
  %v153 = vpop.f32.mrb[0].mxu0
  %v154 = vpop.f32.mrb[0].mxu0
  %v155 = vadd.f32 %v47, %v154
  %v156 = vpop.f32.mrb[0].mxu0
  %157 = vmatprep.mubr.bf16.mxu0 0
  %158 = vmatmul.mubr.bf16.gmra.mrb[0].mxu0 %v69
  %v159 = vpop.f32.mrb[0].mxu0
  %v160 = vadd.f32 %v47, %v159
  %v161 = vpop.f32.mrb[0].mxu0
  %v162 = vpop.f32.mrb[0].mxu0
  %v163 = vpop.f32.mrb[0].mxu0
  %164 = vdwg.mxu0
  %v165 = vmax.f32 %v112, 0.0
  %v166 = vmax.f32 %v115, 0.0
  %v167 = vmax.f32 %v120, 0.0
  %v168 = vmax.f32 %v123, 0.0
  %v169 = vmax.f32 %v128, 0.0
  %v170 = vmax.f32 %v131, 0.0
  %v171 = vmax.f32 %v136, 0.0
  %v172 = vmax.f32 %v139, 0.0
  %v173 = vmax.f32 %v144, 0.0
  %v174 = vmax.f32 %v147, 0.0
  %v175 = vmax.f32 %v152, 0.0
  %v176 = vmax.f32 %v155, 0.0
  %v177 = vmax.f32 %v160, 0.0
  %v178 = vpack.c.bf16 %v166, %v165
  %v179 = vpack.c.bf16 %v168, %v167
  %v180 = vpack.c.bf16 %v170, %v169
  %v181 = vpack.c.bf16 %v172, %v171
  %v182 = vpack.c.bf16 %v174, %v173
  %v183 = vpack.c.bf16 %v176, %v175
  %v184 = vpack.c.bf16 %v177, %v177
  %v185 = vld [vmem:[%s3] sm:$0xf]
  %v186 = vld [vmem:[%s3 + $0x4] sm:$0x1]
  %v187 = vld [vmem:[%s4] sm:$0x1]
  %v189 = vlaneseq
  %v190 = vshrl.u32 %v189, 7
  %v191 = vsub.s32 0, %v190
  %v192 = vrot.slane %v187, %v191
  %v196 = vunpack.c.l.b16 %v185
  %v197 = vunpack.c.l.b16 %v186
  %v198 = vpack.c.b16 %v197, %v196
  %vm199 = vcmask 80896
  %v201 = vsel %vm199, %v178, 0
  %v204 = vsel %vm199, %v179, 0
  %v207 = vsel %vm199, %v180, 0
  %v210 = vsel %vm199, %v181, 0
  %v213 = vsel %vm199, %v182, 0
  %v216 = vsel %vm199, %v183, 0
  %v219 = vsel %vm199, %v184, 0
  %vm221 = vcmask 1044480
  %v223 = vsel %vm221, %v198, 0
  %225 = vmatprep.subr.bf16.mxu0 0
  %226 = vmatpush1.bf16.msra.mxu0 %v223
  %227 = vmatprep.subr.bf16.mxu0 0
  %228 = vmatpush1.bf16.msra.mxu0 0
  %229 = vmatprep.subr.bf16.mxu0 0
  %230 = vmatpush1.bf16.msra.mxu0 0
  %231 = vmatprep.subr.bf16.mxu0 0
  %232 = vmatpush1.bf16.msra.mxu0 0
  %233 = vmatprep.subr.bf16.mxu0 0
  %234 = vmatpush1.bf16.msra.mxu0 0
  %235 = vmatprep.subr.bf16.mxu0 0
  %236 = vmatpush1.bf16.msra.mxu0 0
  %237 = vmatprep.subr.bf16.mxu0 0
  %238 = vmatpush1.bf16.msra.mxu0 0
  %239 = vmatprep.subr.bf16.mxu0 0
  %240 = vmatpush1.bf16.msra.mxu0 0
  %241 = vmatprep.subr.bf16.mxu0 0
  %242 = vmatpush1.bf16.msra.mxu0 0
  %243 = vmatprep.subr.bf16.mxu0 0
  %244 = vmatpush1.bf16.msra.mxu0 0
  %245 = vmatprep.subr.bf16.mxu0 0
  %246 = vmatpush1.bf16.msra.mxu0 0
  %247 = vmatprep.subr.bf16.mxu0 0
  %248 = vmatpush1.bf16.msra.mxu0 0
  %249 = vmatprep.subr.bf16.mxu0 0
  %250 = vmatpush1.bf16.msra.mxu0 0
  %251 = vmatprep.subr.bf16.mxu0 0
  %252 = vmatpush1.bf16.msra.mxu0 0
  %253 = vmatprep.subr.bf16.mxu0 0
  %254 = vmatpush1.bf16.msra.mxu0 0
  %255 = vmatprep.subr.bf16.mxu0 0
  %256 = vmatpush1.bf16.msra.mxu0 0
  %257 = vmatprep.mubr.bf16.mxu0 0
  %258 = vmatmul.mubr.bf16.gmra.mrb[0].mxu0 %v201
  %v259 = vpop.f32.mrb[0].mxu0
  %v260 = vadd.f32 %v192, %v259
  %v261 = vpop.f32.mrb[0].mxu0
  %v262 = vpop.f32.mrb[0].mxu0
  %v263 = vadd.f32 %v192, %v262
  %v264 = vpop.f32.mrb[0].mxu0
  %265 = vmatprep.mubr.bf16.mxu0 0
  %266 = vmatmul.mubr.bf16.gmra.mrb[0].mxu0 %v204
  %v267 = vpop.f32.mrb[0].mxu0
  %v268 = vadd.f32 %v192, %v267
  %v269 = vpop.f32.mrb[0].mxu0
  %v270 = vpop.f32.mrb[0].mxu0
  %v271 = vadd.f32 %v192, %v270
  %v272 = vpop.f32.mrb[0].mxu0
  %273 = vmatprep.mubr.bf16.mxu0 0
  %274 = vmatmul.mubr.bf16.gmra.mrb[0].mxu0 %v207
  %v275 = vpop.f32.mrb[0].mxu0
  %v276 = vadd.f32 %v192, %v275
  %v277 = vpop.f32.mrb[0].mxu0
  %v278 = vpop.f32.mrb[0].mxu0
  %v279 = vadd.f32 %v192, %v278
  %v280 = vpop.f32.mrb[0].mxu0
  %281 = vmatprep.mubr.bf16.mxu0 0
  %282 = vmatmul.mubr.bf16.gmra.mrb[0].mxu0 %v210
  %v283 = vpop.f32.mrb[0].mxu0
  %v284 = vadd.f32 %v192, %v283
  %v285 = vpop.f32.mrb[0].mxu0
  %v286 = vpop.f32.mrb[0].mxu0
  %v287 = vadd.f32 %v192, %v286
  %v288 = vpop.f32.mrb[0].mxu0
  %289 = vmatprep.mubr.bf16.mxu0 0
  %290 = vmatmul.mubr.bf16.gmra.mrb[0].mxu0 %v213
  %v291 = vpop.f32.mrb[0].mxu0
  %v292 = vadd.f32 %v192, %v291
  %v293 = vpop.f32.mrb[0].mxu0
  %v294 = vpop.f32.mrb[0].mxu0
  %v295 = vadd.f32 %v192, %v294
  %v296 = vpop.f32.mrb[0].mxu0
  %297 = vmatprep.mubr.bf16.mxu0 0
  %298 = vmatmul.mubr.bf16.gmra.mrb[0].mxu0 %v216
  %v299 = vpop.f32.mrb[0].mxu0
  %v300 = vadd.f32 %v192, %v299
  %v301 = vpop.f32.mrb[0].mxu0
  %v302 = vpop.f32.mrb[0].mxu0
  %v303 = vadd.f32 %v192, %v302
  %v304 = vpop.f32.mrb[0].mxu0
  %305 = vmatprep.mubr.bf16.mxu0 0
  %306 = vmatmul.mubr.bf16.gmra.mrb[0].mxu0 %v219
  %v307 = vpop.f32.mrb[0].mxu0
  %v308 = vadd.f32 %v192, %v307
  %v309 = vpop.f32.mrb[0].mxu0
  %v310 = vpop.f32.mrb[0].mxu0
  %v311 = vpop.f32.mrb[0].mxu0
  %312 = vdwg.mxu0
  %313 = vst [vmem:[%s5] sm:$0xff] %v260
  %314 = vst [vmem:[%s5 + $0x8] sm:$0xff] %v263
  %315 = vst [vmem:[%s5 + $0x10] sm:$0xff] %v268
  %316 = vst [vmem:[%s5 + $0x18] sm:$0xff] %v271
  %317 = vst [vmem:[%s5 + $0x20] sm:$0xff] %v276
  %318 = vst [vmem:[%s5 + $0x28] sm:$0xff] %v279
  %319 = vst [vmem:[%s5 + $0x30] sm:$0xff] %v284
  %320 = vst [vmem:[%s5 + $0x38] sm:$0xff] %v287
  %321 = vst [vmem:[%s5 + $0x40] sm:$0xff] %v292
  %322 = vst [vmem:[%s5 + $0x48] sm:$0xff] %v295
  %323 = vst [vmem:[%s5 + $0x50] sm:$0xff] %v300
  %324 = vst [vmem:[%s5 + $0x58] sm:$0xff] %v303
  %325 = vst [vmem:[%s5 + $0x60] sm:$0xff] %v308
  // Predicated region
  $region22: #{net_forward.1} parent=0 // pred_check
    _
  $region23: #{net_forward.1} parent=0 // pred_check_branch
    %327 = sbr.rel (0) target = $region25
  $region24: #{net_forward.1} parent=0 // pred_region
    _
  $region25: #{net_forward.1} parent=0 // pred_fallthru
    _
  // Predicated region
  $region26: #{net_forward.1} parent=0 // pred_check
    _
  $region27: #{net_forward.1} parent=0 // pred_check_branch
    %329 = sbr.rel (0) target = $region29
  $region28: #{net_forward.1} parent=0 // pred_region
    _
  $region29: #{net_forward.1} parent=0 // pred_fallthru
    _

</llo_original>
